<compile_context>
chip_gen: v7x
topology: tpu7x:2x2x1
jax: 0.10.0
libtpu: 0.0.40
codegen_flags: <defaults>
</compile_context>

<pallas_src>
import jax
import jax.numpy as jnp
from jax.experimental import pallas as pl
from jax.experimental.pallas import tpu as pltpu


def _attention_kernel(x_ref, w_ref, b_ref, o_ref):
    # x_ref: (tm, D) row tile (native dtype), w_ref: (1, D), b_ref: (1, 1) in SMEM.
    x = x_ref[...]                                     # (tm, D), native dtype
    w = w_ref[...]                                     # (1, D),  native dtype
    # VPU multiply in native dtype, f32 accumulation over the lane axis (XLU).
    logits = jnp.sum(x * w, axis=-1, keepdims=True, dtype=jnp.float32)  # (tm, 1)
    attn = jax.nn.sigmoid(logits + b_ref[0, 0])        # (tm, 1) f32
    # Only the (tm, 1) attention vector is cast; never the full (tm, D) tile.
    o_ref[...] = (attn.astype(x.dtype) * x).astype(o_ref.dtype)


def _round_up(a, m):
    return ((a + m - 1) // m) * m


def _tpu_generation_info():
    """(num_tensorcores_per_chip, tile_vmem_budget_bytes, vmem_limit_bytes)."""
    kind = ""
    try:
        kind = jax.devices()[0].device_kind.lower()
    except Exception:
        pass
    if "v7" in kind or "7x" in kind:
        # v7x: 2 TensorCores/chip, only 64 MiB physical VMEM per core.
        return 2, 8 * 1024 * 1024, 28 * 1024 * 1024
    if "v5" in kind or "v6" in kind:
        # v5e / v6e: single TensorCore, 128 MiB physical VMEM.
        return 1, 16 * 1024 * 1024, 64 * 1024 * 1024
    # Unknown generation: conservative numbers that fit every TPU.
    return 1, 8 * 1024 * 1024, 28 * 1024 * 1024


def _pick_tm(n_rows, d, dtype, num_cores, tile_budget_bytes):
    """Row tile sized by bytes-per-step (not a row cap), packing-aligned,
    VMEM-budgeted, and split for megacore only on multi-TC chips."""
    itemsize = jnp.dtype(dtype).itemsize
    # Rows per fully packed sublane group: 8 (f32), 16 (bf16), 32 (int8/fp8).
    pack = max(8, 32 // itemsize)
    row_bytes = max(1, d * itemsize)
    # ~2 MiB x tile: amortizes the ~0.35us/step grid overhead into the
    # measured 85%+ HBM-roofline regime regardless of D.
    target_x_tile_bytes = 2 * 1024 * 1024
    tm = target_x_tile_bytes // row_bytes
    # VMEM budget covers double-buffered in + out tiles (4 tiles of (tm, D)).
    tm = min(tm, tile_budget_bytes // (4 * row_bytes))
    tm = max(pack, (tm // pack) * pack)
    # No point in a block larger than the (packing-rounded) input.
    tm = min(tm, _round_up(n_rows, pack))
    # Megacore (v7x): keep >= 2 grid steps per TensorCore when N allows, so
    # each core still overlaps DMA with compute.  No forced split on 1-TC chips.
    if num_cores > 1:
        min_steps = 2 * num_cores
        if n_rows >= pack * min_steps and pl.cdiv(n_rows, tm) < min_steps:
            tm = max(pack, _round_up(pl.cdiv(n_rows, min_steps), pack))
    return tm


def attention_layer(x, w, b, *, tm=None):
    """x: (N, D); w: (1, D) lane-dense Linear weight; b: (1, 1) bias.
    Returns sigmoid(x @ w.T + b) * x."""
    N, D = x.shape
    num_cores, tile_budget, vmem_limit = _tpu_generation_info()
    if tm is None:
        tm = _pick_tm(N, D, x.dtype, num_cores, tile_budget)

    # Ragged N handled by the pipeline's partial-block masking; no pad/slice.
    grid = (pl.cdiv(N, tm),)

    return pl.pallas_call(
        _attention_kernel,
        out_shape=jax.ShapeDtypeStruct((N, D), x.dtype),
        grid_spec=pltpu.PrefetchScalarGridSpec(
            num_scalar_prefetch=0,
            grid=grid,
            in_specs=[
                pl.BlockSpec((tm, D), lambda i: (i, 0)),   # x row tile (pipelined)
                pl.BlockSpec((1, D), lambda i: (0, 0)),    # weight, resident (DMA'd once)
                pl.BlockSpec(memory_space=pltpu.SMEM),     # bias scalar in SMEM
            ],
            out_specs=pl.BlockSpec((tm, D), lambda i: (i, 0)),
        ),
        compiler_params=pltpu.CompilerParams(
            dimension_semantics=("parallel",),             # shards rows across TCs (v7x)
            vmem_limit_bytes=vmem_limit,                   # generation-aware ceiling
        ),
    )(x, w, b)


if __name__ == "__main__":
    key = jax.random.PRNGKey(0)
    k_x, k_w, k_b = jax.random.split(key, 3)

    # Small shapes consistent with the module: 2 graphs * 128 nodes, in_dim=128.
    batch, nodes, in_dim = 2, 128, 128
    x_3d = jax.random.normal(k_x, (batch, nodes, in_dim), dtype=jnp.float32)

    # Deterministic parameter init (nn.Linear(in_dim, 1): weight (1, in_dim), bias (1,)).
    bound = 1.0 / (in_dim ** 0.5)
    w_torch = jax.random.uniform(k_w, (1, in_dim), minval=-bound, maxval=bound, dtype=jnp.float32)
    b_torch = jax.random.uniform(k_b, (1,), minval=-bound, maxval=bound, dtype=jnp.float32)

    # Glue: flatten leading dims; weight stays lane-dense (1, D); bias to (1, 1).
    x2d = x_3d.reshape(batch * nodes, in_dim)
    w = w_torch                          # (1, in_dim), lane-dense
    b = b_torch.reshape(1, 1)            # (1, 1)

    out2d = attention_layer(x2d, w, b)   # tm auto-picked (bytes-targeted)
    out = out2d.reshape(batch, nodes, in_dim)
    jax.block_until_ready(out)

    # Reference check against plain JAX.
    ref = jax.nn.sigmoid(x_3d @ w_torch.T + b_torch) * x_3d
    assert jnp.allclose(out, ref, atol=1e-5, rtol=1e-5), "mismatch vs reference"

    # Ragged-N path: no pad + slice round-trip anymore (cdiv grid).
    x_odd = x2d[:200]
    ref_odd = jax.nn.sigmoid(x_odd @ w_torch.T + b_torch) * x_odd
    out_odd = attention_layer(x_odd, w, b)
    jax.block_until_ready(out_odd)
    assert jnp.allclose(out_odd, ref_odd, atol=1e-5, rtol=1e-5), "mismatch (ragged N)"

    # Force a partial last block (200 % 64 = 8 rows) to exercise the masked
    # partial-block store path on every generation.
    out_part = attention_layer(x_odd, w, b, tm=64)
    jax.block_until_ready(out_part)
    assert jnp.allclose(out_part, ref_odd, atol=1e-5, rtol=1e-5), "mismatch (partial block)"

    print("KERNEL_OK")
</pallas_src>

<mosaic_0001>
module attributes {stable_mosaic.version = 11 : i64} {
  func.func @_attention_kernel(%arg0: i32, %arg1: memref<256x128xf32, #tpu.memory_space<vmem>>, %arg2: memref<1x128xf32, #tpu.memory_space<vmem>>, %arg3: memref<1x1xf32, #tpu.memory_space<smem>>, %arg4: memref<256x128xf32, #tpu.memory_space<vmem>>) attributes {dimension_semantics = [#tpu.dimension_semantics<parallel>], iteration_bounds = array<i64: 1>, scalar_prefetch = 0 : i64, scratch_operands = 0 : i64, tpu.core_type = #tpu.core_type<tc>, window_params = [{transform_indices = @transform_0, window_bounds = array<i64: 256, 128>}, {pipeline_mode = #tpu.pipeline_mode<synchronous>, transform_indices = @transform_1, window_bounds = array<i64: 1, 128>}, {transform_indices = @transform_2, window_bounds = array<i64: 1, 1>}, {transform_indices = @transform_3, window_bounds = array<i64: 256, 128>}]} {
    %c0 = arith.constant 0 : index
    %c0_0 = arith.constant 0 : index
    %0 = vector.load %arg1[%c0, %c0_0] : memref<256x128xf32, #tpu.memory_space<vmem>>, vector<256x128xf32>
    %c0_1 = arith.constant 0 : index
    %c0_2 = arith.constant 0 : index
    %1 = vector.load %arg2[%c0_1, %c0_2] : memref<1x128xf32, #tpu.memory_space<vmem>>, vector<1x128xf32>
    %2 = vector.broadcast %1 : vector<1x128xf32> to vector<256x128xf32>
    %3 = arith.mulf %0, %2 : vector<256x128xf32>
    %cst = arith.constant dense<0.000000e+00> : vector<256xf32>
    %4 = vector.multi_reduction <add>, %3, %cst [1] : vector<256x128xf32> to vector<256xf32>
    %5 = vector.shape_cast %4 : vector<256xf32> to vector<256x1xf32>
    %c0_3 = arith.constant 0 : index
    %c0_4 = arith.constant 0 : index
    %6 = memref.load %arg3[%c0_3, %c0_4] : memref<1x1xf32, #tpu.memory_space<smem>>
    %7 = vector.broadcast %6 : f32 to vector<256x1xf32>
    %8 = arith.addf %5, %7 : vector<256x1xf32>
    %9 = arith.negf %8 : vector<256x1xf32>
    %10 = math.exp %9 : vector<256x1xf32>
    %cst_5 = arith.constant 1.000000e+00 : f32
    %11 = vector.broadcast %cst_5 : f32 to vector<256x1xf32>
    %12 = arith.addf %11, %10 : vector<256x1xf32>
    %13 = arith.divf %11, %12 : vector<256x1xf32>
    %14 = vector.broadcast %13 : vector<256x1xf32> to vector<256x128xf32>
    %15 = arith.mulf %14, %0 : vector<256x128xf32>
    %c0_6 = arith.constant 0 : index
    %c0_7 = arith.constant 0 : index
    %16 = vector.load %arg4[%c0_6, %c0_7] : memref<256x128xf32, #tpu.memory_space<vmem>>, vector<256x128xf32>
    tpu.vector_store %arg4[%c0_6, %c0_7], %15 {strides = array<i32>} : memref<256x128xf32, #tpu.memory_space<vmem>>, vector<256x128xf32>,
    return
  }
  func.func @transform_0(%arg0: i32) -> (i32, i32) {
    %c0_i32 = arith.constant 0 : i32
    %c0_i32_0 = arith.constant 0 : i32
    return %arg0, %c0_i32 : i32, i32
  }
  func.func @transform_1(%arg0: i32) -> (i32, i32) {
    %c0_i32 = arith.constant 0 : i32
    %c0_i32_0 = arith.constant 0 : i32
    %c0_i32_1 = arith.constant 0 : i32
    return %c0_i32, %c0_i32_0 : i32, i32
  }
  func.func @transform_2(%arg0: i32) -> (i32, i32) {
    %c0_i32 = arith.constant 0 : i32
    %c0_i32_0 = arith.constant 0 : i32
    %c0_i32_1 = arith.constant 0 : i32
    return %c0_i32, %c0_i32_0 : i32, i32
  }
  func.func @transform_3(%arg0: i32) -> (i32, i32) {
    %c0_i32 = arith.constant 0 : i32
    %c0_i32_0 = arith.constant 0 : i32
    return %arg0, %c0_i32 : i32, i32
  }
}

</mosaic_0001>

<llo_original>
// kernel: tpu_custom_call.1
$region0: #{tpu_custom_call.1}
  #allocation0 [shape = 'u32[]', space=smem, size = 0x4, offset = 0x4, fixed_abs, tag = 'smem constant byte address 0x4 - core index']
  #allocation1 [shape = 'u32[144,128]{1,0:T(1,128)}', space=vmem, size = 0x12000, scoped, tag = 'internal scratch']
  #allocation2 [shape = 'f32[1,1]{1,0:T(1,128)S(6)}', space=smem, size = 0x200, scoped, tag = 'scoped memory for tpu_custom_call.1']
  %s0 = inlined_call_operand.hbm [shape: f32[256,128], index: 0, kind: input, shape index: {}]
  %s1 = inlined_call_operand.vmem [shape: f32[1,128], index: 1, kind: input, shape index: {}]
  %s2 = inlined_call_operand.<no memory space> [shape: f32[1,1], index: 2, kind: input, shape index: {}]
  %s3 = inlined_call_operand.hbm [shape: f32[256,128], index: 3, kind: output, shape index: {}]
  %s4 = sld [smem:[#allocation0]]
  $region26: #{tpu_custom_call.1} parent=0
    _
  %s6 = ssub.s32 1, %s4
  %s7 = scalar_select 0, %s6, %s4
  %8 = sst [smem:[#allocation2]] %s2
  $region1: #{tpu_custom_call.1} parent=0
    #allocation3 [shape = 'u8[131072]{0}', space=vmem, size = 0x20000, scoped, tag = 'input window, operand 0, single buffered']
    #allocation4 [shape = 's32[1]{0}', space=sflag, size = 0x4, scoped, tag = 'scoped memory for tpu_custom_call.1']
    #allocation5 [shape = 's32[1]{0}', space=sflag, size = 0x4, scoped, tag = 'scoped memory for tpu_custom_call.1']
    #allocation6 [shape = 'u8[131072]{0}', space=vmem, size = 0x20000, scoped, tag = 'output window, operand 0, single buffered']
    %9 = vsyncpa [#allocation4], 0
    %10 = vsyncpa [#allocation5], 0
    // Predicated region
    $region2: #{tpu_custom_call.1} parent=1 // pred_check
      _
    $region3: #{tpu_custom_call.1} parent=1 // pred_check_branch
      %12 = sbr.rel (0) target = $region5
    $region4: #{tpu_custom_call.1} parent=1 // pred_region
      %s14 = ssub.s32 4096, 4096
      %15 = vsyncadd [#allocation4], %s14
      %s16 = sshll.u32 [#allocation3], 4
      %s17 = int_to_ptr.vmem [resolvable:$true] %s16
      %22 = dma.hbm_to_vmem [thread:$0]  %s0, 4096, %s17, [#allocation4], 128, 128, 8
    $region5: #{tpu_custom_call.1} parent=1 // pred_fallthru
      _
    // Predicated region
    $region6: #{tpu_custom_call.1} parent=1 // pred_check
      _
    $region7: #{tpu_custom_call.1} parent=1 // pred_check_branch
      %24 = sbr.rel (0) target = $region9
    $region8: #{tpu_custom_call.1} parent=1 // pred_region
      _
    $region9: #{tpu_custom_call.1} parent=1 // pred_fallthru
      _
    // Predicated region
    $region10: #{tpu_custom_call.1} parent=1 // pred_check
      _
    $region11: #{tpu_custom_call.1} parent=1 // pred_check_branch
      %26 = sbr.rel (0) target = $region13
    $region12: #{tpu_custom_call.1} parent=1 // pred_region
      _
    $region13: #{tpu_custom_call.1} parent=1 // pred_fallthru
      _
    // Predicated region
    $region14: #{tpu_custom_call.1} parent=1 // pred_check
      _
    $region15: #{tpu_custom_call.1} parent=1 // pred_check_branch
      %28 = sbr.rel (0) target = $region17
    $region16: #{tpu_custom_call.1} parent=1 // pred_region
      %29 = dma.done [#allocation4], 4096
    $region17: #{tpu_custom_call.1} parent=1 // pred_fallthru
      _
    %v30 = vld [vmem:[#allocation3] sm:$0xff]
    %v31 = vld [vmem:[#allocation3 + $0x8] sm:$0xff]
    %v32 = vld [vmem:[#allocation3 + $0x10] sm:$0xff]
    %v33 = vld [vmem:[#allocation3 + $0x18] sm:$0xff]
    %v34 = vld [vmem:[#allocation3 + $0x20] sm:$0xff]
    %v35 = vld [vmem:[#allocation3 + $0x28] sm:$0xff]
    %v36 = vld [vmem:[#allocation3 + $0x30] sm:$0xff]
    %v37 = vld [vmem:[#allocation3 + $0x38] sm:$0xff]
    %v38 = vld [vmem:[#allocation3 + $0x40] sm:$0xff]
    %v39 = vld [vmem:[#allocation3 + $0x48] sm:$0xff]
    %v40 = vld [vmem:[#allocation3 + $0x50] sm:$0xff]
    %v41 = vld [vmem:[#allocation3 + $0x58] sm:$0xff]
    %v42 = vld [vmem:[#allocation3 + $0x60] sm:$0xff]
    %v43 = vld [vmem:[#allocation3 + $0x68] sm:$0xff]
    %v44 = vld [vmem:[#allocation3 + $0x70] sm:$0xff]
    %v45 = vld [vmem:[#allocation3 + $0x78] sm:$0xff]
    %v46 = vld [vmem:[#allocation3 + $0x80] sm:$0xff]
    %v47 = vld [vmem:[#allocation3 + $0x88] sm:$0xff]
    %v48 = vld [vmem:[#allocation3 + $0x90] sm:$0xff]
    %v49 = vld [vmem:[#allocation3 + $0x98] sm:$0xff]
    %v50 = vld [vmem:[#allocation3 + $0xa0] sm:$0xff]
    %v51 = vld [vmem:[#allocation3 + $0xa8] sm:$0xff]
    %v52 = vld [vmem:[#allocation3 + $0xb0] sm:$0xff]
    %v53 = vld [vmem:[#allocation3 + $0xb8] sm:$0xff]
    %v54 = vld [vmem:[#allocation3 + $0xc0] sm:$0xff]
    %v55 = vld [vmem:[#allocation3 + $0xc8] sm:$0xff]
    %v56 = vld [vmem:[#allocation3 + $0xd0] sm:$0xff]
    %v57 = vld [vmem:[#allocation3 + $0xd8] sm:$0xff]
    %v58 = vld [vmem:[#allocation3 + $0xe0] sm:$0xff]
    %v59 = vld [vmem:[#allocation3 + $0xe8] sm:$0xff]
    %v60 = vld [vmem:[#allocation3 + $0xf0] sm:$0xff]
    %v61 = vld [vmem:[#allocation3 + $0xf8] sm:$0xff]
    %v62 = vld [vmem:[%s1] sm:$0x1]
    %v64 = vlaneseq
    %v65 = vshrl.u32 %v64, 7
    %v66 = vsub.s32 0, %v65
    %v67 = vrot.slane %v62, %v66
    %v69 = vmul.f32 %v30, %v67
    %v70 = vmul.f32 %v31, %v67
    %v71 = vmul.f32 %v32, %v67
    %v72 = vmul.f32 %v33, %v67
    %v73 = vmul.f32 %v34, %v67
    %v74 = vmul.f32 %v35, %v67
    %v75 = vmul.f32 %v36, %v67
    %v76 = vmul.f32 %v37, %v67
    %v77 = vmul.f32 %v38, %v67
    %v78 = vmul.f32 %v39, %v67
    %v79 = vmul.f32 %v40, %v67
    %v80 = vmul.f32 %v41, %v67
    %v81 = vmul.f32 %v42, %v67
    %v82 = vmul.f32 %v43, %v67
    %v83 = vmul.f32 %v44, %v67
    %v84 = vmul.f32 %v45, %v67
    %v85 = vmul.f32 %v46, %v67
    %v86 = vmul.f32 %v47, %v67
    %v87 = vmul.f32 %v48, %v67
    %v88 = vmul.f32 %v49, %v67
    %v89 = vmul.f32 %v50, %v67
    %v90 = vmul.f32 %v51, %v67
    %v91 = vmul.f32 %v52, %v67
    %v92 = vmul.f32 %v53, %v67
    %v93 = vmul.f32 %v54, %v67
    %v94 = vmul.f32 %v55, %v67
    %v95 = vmul.f32 %v56, %v67
    %v96 = vmul.f32 %v57, %v67
    %v97 = vmul.f32 %v58, %v67
    %v98 = vmul.f32 %v59, %v67
    %v99 = vmul.f32 %v60, %v67
    %v100 = vmul.f32 %v61, %v67
    %101 = vadd.xlane.f32.xlu0 %v69
    %v102 = vpop.xlane.xlu0 %101
    %103 = vadd.xlane.f32.xlu0 %v70
    %v104 = vpop.xlane.xlu0 %103
    %105 = vadd.xlane.f32.xlu0 %v71
    %v106 = vpop.xlane.xlu0 %105
    %107 = vadd.xlane.f32.xlu0 %v72
    %v108 = vpop.xlane.xlu0 %107
    %109 = vadd.xlane.f32.xlu0 %v73
    %v110 = vpop.xlane.xlu0 %109
    %111 = vadd.xlane.f32.xlu0 %v74
    %v112 = vpop.xlane.xlu0 %111
    %113 = vadd.xlane.f32.xlu0 %v75
    %v114 = vpop.xlane.xlu0 %113
    %115 = vadd.xlane.f32.xlu0 %v76
    %v116 = vpop.xlane.xlu0 %115
    %117 = vadd.xlane.f32.xlu0 %v77
    %v118 = vpop.xlane.xlu0 %117
    %119 = vadd.xlane.f32.xlu0 %v78
    %v120 = vpop.xlane.xlu0 %119
    %121 = vadd.xlane.f32.xlu0 %v79
    %v122 = vpop.xlane.xlu0 %121
    %123 = vadd.xlane.f32.xlu0 %v80
    %v124 = vpop.xlane.xlu0 %123
    %125 = vadd.xlane.f32.xlu0 %v81
    %v126 = vpop.xlane.xlu0 %125
    %127 = vadd.xlane.f32.xlu0 %v82
    %v128 = vpop.xlane.xlu0 %127
    %129 = vadd.xlane.f32.xlu0 %v83
    %v130 = vpop.xlane.xlu0 %129
    %131 = vadd.xlane.f32.xlu0 %v84
    %v132 = vpop.xlane.xlu0 %131
    %133 = vadd.xlane.f32.xlu0 %v85
    %v134 = vpop.xlane.xlu0 %133
    %135 = vadd.xlane.f32.xlu0 %v86
    %v136 = vpop.xlane.xlu0 %135
    %137 = vadd.xlane.f32.xlu0 %v87
    %v138 = vpop.xlane.xlu0 %137
    %139 = vadd.xlane.f32.xlu0 %v88
    %v140 = vpop.xlane.xlu0 %139
    %141 = vadd.xlane.f32.xlu0 %v89
    %v142 = vpop.xlane.xlu0 %141
    %143 = vadd.xlane.f32.xlu0 %v90
    %v144 = vpop.xlane.xlu0 %143
    %145 = vadd.xlane.f32.xlu0 %v91
    %v146 = vpop.xlane.xlu0 %145
    %147 = vadd.xlane.f32.xlu0 %v92
    %v148 = vpop.xlane.xlu0 %147
    %149 = vadd.xlane.f32.xlu0 %v93
    %v150 = vpop.xlane.xlu0 %149
    %151 = vadd.xlane.f32.xlu0 %v94
    %v152 = vpop.xlane.xlu0 %151
    %153 = vadd.xlane.f32.xlu0 %v95
    %v154 = vpop.xlane.xlu0 %153
    %155 = vadd.xlane.f32.xlu0 %v96
    %v156 = vpop.xlane.xlu0 %155
    %157 = vadd.xlane.f32.xlu0 %v97
    %v158 = vpop.xlane.xlu0 %157
    %159 = vadd.xlane.f32.xlu0 %v98
    %v160 = vpop.xlane.xlu0 %159
    %161 = vadd.xlane.f32.xlu0 %v99
    %v162 = vpop.xlane.xlu0 %161
    %163 = vadd.xlane.f32.xlu0 %v100
    %v164 = vpop.xlane.xlu0 %163
    %s165 = sld [smem:[#allocation2]]
    %v166 = vstv %s165
    %v167 = vadd.f32 %v102, %v166
    %v168 = vadd.f32 %v104, %v166
    %v169 = vadd.f32 %v106, %v166
    %v170 = vadd.f32 %v108, %v166
    %v171 = vadd.f32 %v110, %v166
    %v172 = vadd.f32 %v112, %v166
    %v173 = vadd.f32 %v114, %v166
    %v174 = vadd.f32 %v116, %v166
    %v175 = vadd.f32 %v118, %v166
    %v176 = vadd.f32 %v120, %v166
    %v177 = vadd.f32 %v122, %v166
    %v178 = vadd.f32 %v124, %v166
    %v179 = vadd.f32 %v126, %v166
    %v180 = vadd.f32 %v128, %v166
    %v181 = vadd.f32 %v130, %v166
    %v182 = vadd.f32 %v132, %v166
    %v183 = vadd.f32 %v134, %v166
    %v184 = vadd.f32 %v136, %v166
    %v185 = vadd.f32 %v138, %v166
    %v186 = vadd.f32 %v140, %v166
    %v187 = vadd.f32 %v142, %v166
    %v188 = vadd.f32 %v144, %v166
    %v189 = vadd.f32 %v146, %v166
    %v190 = vadd.f32 %v148, %v166
    %v191 = vadd.f32 %v150, %v166
    %v192 = vadd.f32 %v152, %v166
    %v193 = vadd.f32 %v154, %v166
    %v194 = vadd.f32 %v156, %v166
    %v195 = vadd.f32 %v158, %v166
    %v196 = vadd.f32 %v160, %v166
    %v197 = vadd.f32 %v162, %v166
    %v198 = vadd.f32 %v164, %v166
    %v199 = vxor.u32 %v167, 2147483648
    %v200 = vxor.u32 %v168, 2147483648
    %v201 = vxor.u32 %v169, 2147483648
    %v202 = vxor.u32 %v170, 2147483648
    %v203 = vxor.u32 %v171, 2147483648
    %v204 = vxor.u32 %v172, 2147483648
    %v205 = vxor.u32 %v173, 2147483648
    %v206 = vxor.u32 %v174, 2147483648
    %v207 = vxor.u32 %v175, 2147483648
    %v208 = vxor.u32 %v176, 2147483648
    %v209 = vxor.u32 %v177, 2147483648
    %v210 = vxor.u32 %v178, 2147483648
    %v211 = vxor.u32 %v179, 2147483648
    %v212 = vxor.u32 %v180, 2147483648
    %v213 = vxor.u32 %v181, 2147483648
    %v214 = vxor.u32 %v182, 2147483648
    %v215 = vxor.u32 %v183, 2147483648
    %v216 = vxor.u32 %v184, 2147483648
    %v217 = vxor.u32 %v185, 2147483648
    %v218 = vxor.u32 %v186, 2147483648
    %v219 = vxor.u32 %v187, 2147483648
    %v220 = vxor.u32 %v188, 2147483648
    %v221 = vxor.u32 %v189, 2147483648
    %v222 = vxor.u32 %v190, 2147483648
    %v223 = vxor.u32 %v191, 2147483648
    %v224 = vxor.u32 %v192, 2147483648
    %v225 = vxor.u32 %v193, 2147483648
    %v226 = vxor.u32 %v194, 2147483648
    %v227 = vxor.u32 %v195, 2147483648
    %v228 = vxor.u32 %v196, 2147483648
    %v229 = vxor.u32 %v197, 2147483648
    %v230 = vxor.u32 %v198, 2147483648
    %v231 = vmul.f32 %v199, 1.442695
    %v232 = vpow.pop %v231
    %v233 = vmul.f32 %v200, 1.442695
    %v234 = vpow.pop %v233
    %v235 = vmul.f32 %v201, 1.442695
    %v236 = vpow.pop %v235
    %v237 = vmul.f32 %v202, 1.442695
    %v238 = vpow.pop %v237
    %v239 = vmul.f32 %v203, 1.442695
    %v240 = vpow.pop %v239
    %v241 = vmul.f32 %v204, 1.442695
    %v242 = vpow.pop %v241
    %v243 = vmul.f32 %v205, 1.442695
    %v244 = vpow.pop %v243
    %v245 = vmul.f32 %v206, 1.442695
    %v246 = vpow.pop %v245
    %v247 = vmul.f32 %v207, 1.442695
    %v248 = vpow.pop %v247
    %v249 = vmul.f32 %v208, 1.442695
    %v250 = vpow.pop %v249
    %v251 = vmul.f32 %v209, 1.442695
    %v252 = vpow.pop %v251
    %v253 = vmul.f32 %v210, 1.442695
    %v254 = vpow.pop %v253
    %v255 = vmul.f32 %v211, 1.442695
    %v256 = vpow.pop %v255
    %v257 = vmul.f32 %v212, 1.442695
    %v258 = vpow.pop %v257
    %v259 = vmul.f32 %v213, 1.442695
    %v260 = vpow.pop %v259
    %v261 = vmul.f32 %v214, 1.442695
    %v262 = vpow.pop %v261
    %v263 = vmul.f32 %v215, 1.442695
    %v264 = vpow.pop %v263
    %v265 = vmul.f32 %v216, 1.442695
    %v266 = vpow.pop %v265
    %v267 = vmul.f32 %v217, 1.442695
    %v268 = vpow.pop %v267
    %v269 = vmul.f32 %v218, 1.442695
    %v270 = vpow.pop %v269
    %v271 = vmul.f32 %v219, 1.442695
    %v272 = vpow.pop %v271
    %v273 = vmul.f32 %v220, 1.442695
    %v274 = vpow.pop %v273
    %v275 = vmul.f32 %v221, 1.442695
    %v276 = vpow.pop %v275
    %v277 = vmul.f32 %v222, 1.442695
    %v278 = vpow.pop %v277
    %v279 = vmul.f32 %v223, 1.442695
    %v280 = vpow.pop %v279
    %v281 = vmul.f32 %v224, 1.442695
    %v282 = vpow.pop %v281
    %v283 = vmul.f32 %v225, 1.442695
    %v284 = vpow.pop %v283
    %v285 = vmul.f32 %v226, 1.442695
    %v286 = vpow.pop %v285
    %v287 = vmul.f32 %v227, 1.442695
    %v288 = vpow.pop %v287
    %v289 = vmul.f32 %v228, 1.442695
    %v290 = vpow.pop %v289
    %v291 = vmul.f32 %v229, 1.442695
    %v292 = vpow.pop %v291
    %v293 = vmul.f32 %v230, 1.442695
    %v294 = vpow.pop %v293
    %v295 = vadd.f32 %v232, 1.0
    %v296 = vadd.f32 %v234, 1.0
    %v297 = vadd.f32 %v236, 1.0
    %v298 = vadd.f32 %v238, 1.0
    %v299 = vadd.f32 %v240, 1.0
    %v300 = vadd.f32 %v242, 1.0
    %v301 = vadd.f32 %v244, 1.0
    %v302 = vadd.f32 %v246, 1.0
    %v303 = vadd.f32 %v248, 1.0
    %v304 = vadd.f32 %v250, 1.0
    %v305 = vadd.f32 %v252, 1.0
    %v306 = vadd.f32 %v254, 1.0
    %v307 = vadd.f32 %v256, 1.0
    %v308 = vadd.f32 %v258, 1.0
    %v309 = vadd.f32 %v260, 1.0
    %v310 = vadd.f32 %v262, 1.0
    %v311 = vadd.f32 %v264, 1.0
    %v312 = vadd.f32 %v266, 1.0
    %v313 = vadd.f32 %v268, 1.0
    %v314 = vadd.f32 %v270, 1.0
    %v315 = vadd.f32 %v272, 1.0
    %v316 = vadd.f32 %v274, 1.0
    %v317 = vadd.f32 %v276, 1.0
    %v318 = vadd.f32 %v278, 1.0
    %v319 = vadd.f32 %v280, 1.0
    %v320 = vadd.f32 %v282, 1.0
    %v321 = vadd.f32 %v284, 1.0
    %v322 = vadd.f32 %v286, 1.0
    %v323 = vadd.f32 %v288, 1.0
    %v324 = vadd.f32 %v290, 1.0
    %v325 = vadd.f32 %v292, 1.0
    %v326 = vadd.f32 %v294, 1.0
    %v327 = vrcp.pop %v295
    %v328 = vmul.f32 1.0, %v327
    %v329 = vrcp.pop %v296
    %v330 = vmul.f32 1.0, %v329
    %v331 = vrcp.pop %v297
    %v332 = vmul.f32 1.0, %v331
    %v333 = vrcp.pop %v298
    %v334 = vmul.f32 1.0, %v333
    %v335 = vrcp.pop %v299
    %v336 = vmul.f32 1.0, %v335
    %v337 = vrcp.pop %v300
    %v338 = vmul.f32 1.0, %v337
    %v339 = vrcp.pop %v301
    %v340 = vmul.f32 1.0, %v339
    %v341 = vrcp.pop %v302
    %v342 = vmul.f32 1.0, %v341
    %v343 = vrcp.pop %v303
    %v344 = vmul.f32 1.0, %v343
    %v345 = vrcp.pop %v304
    %v346 = vmul.f32 1.0, %v345
    %v347 = vrcp.pop %v305
    %v348 = vmul.f32 1.0, %v347
    %v349 = vrcp.pop %v306
    %v350 = vmul.f32 1.0, %v349
    %v351 = vrcp.pop %v307
    %v352 = vmul.f32 1.0, %v351
    %v353 = vrcp.pop %v308
    %v354 = vmul.f32 1.0, %v353
    %v355 = vrcp.pop %v309
    %v356 = vmul.f32 1.0, %v355
    %v357 = vrcp.pop %v310
    %v358 = vmul.f32 1.0, %v357
    %v359 = vrcp.pop %v311
    %v360 = vmul.f32 1.0, %v359
    %v361 = vrcp.pop %v312
    %v362 = vmul.f32 1.0, %v361
    %v363 = vrcp.pop %v313
    %v364 = vmul.f32 1.0, %v363
    %v365 = vrcp.pop %v314
    %v366 = vmul.f32 1.0, %v365
    %v367 = vrcp.pop %v315
    %v368 = vmul.f32 1.0, %v367
    %v369 = vrcp.pop %v316
    %v370 = vmul.f32 1.0, %v369
    %v371 = vrcp.pop %v317
    %v372 = vmul.f32 1.0, %v371
    %v373 = vrcp.pop %v318
    %v374 = vmul.f32 1.0, %v373
    %v375 = vrcp.pop %v319
    %v376 = vmul.f32 1.0, %v375
    %v377 = vrcp.pop %v320
    %v378 = vmul.f32 1.0, %v377
    %v379 = vrcp.pop %v321
    %v380 = vmul.f32 1.0, %v379
    %v381 = vrcp.pop %v322
    %v382 = vmul.f32 1.0, %v381
    %v383 = vrcp.pop %v323
    %v384 = vmul.f32 1.0, %v383
    %v385 = vrcp.pop %v324
    %v386 = vmul.f32 1.0, %v385
    %v387 = vrcp.pop %v325
    %v388 = vmul.f32 1.0, %v387
    %v389 = vrcp.pop %v326
    %v390 = vmul.f32 1.0, %v389
    %v391 = vmul.f32 %v328, %v30
    %v392 = vmul.f32 %v330, %v31
    %v393 = vmul.f32 %v332, %v32
    %v394 = vmul.f32 %v334, %v33
    %v395 = vmul.f32 %v336, %v34
    %v396 = vmul.f32 %v338, %v35
    %v397 = vmul.f32 %v340, %v36
    %v398 = vmul.f32 %v342, %v37
    %v399 = vmul.f32 %v344, %v38
    %v400 = vmul.f32 %v346, %v39
    %v401 = vmul.f32 %v348, %v40
    %v402 = vmul.f32 %v350, %v41
    %v403 = vmul.f32 %v352, %v42
    %v404 = vmul.f32 %v354, %v43
    %v405 = vmul.f32 %v356, %v44
    %v406 = vmul.f32 %v358, %v45
    %v407 = vmul.f32 %v360, %v46
    %v408 = vmul.f32 %v362, %v47
    %v409 = vmul.f32 %v364, %v48
    %v410 = vmul.f32 %v366, %v49
    %v411 = vmul.f32 %v368, %v50
    %v412 = vmul.f32 %v370, %v51
    %v413 = vmul.f32 %v372, %v52
    %v414 = vmul.f32 %v374, %v53
    %v415 = vmul.f32 %v376, %v54
    %v416 = vmul.f32 %v378, %v55
    %v417 = vmul.f32 %v380, %v56
    %v418 = vmul.f32 %v382, %v57
    %v419 = vmul.f32 %v384, %v58
    %v420 = vmul.f32 %v386, %v59
    %v421 = vmul.f32 %v388, %v60
    %v422 = vmul.f32 %v390, %v61
    %423 = vst [vmem:[#allocation6] sm:$0xff] %v391
    %424 = vst [vmem:[#allocation6 + $0x8] sm:$0xff] %v392
    %425 = vst [vmem:[#allocation6 + $0x10] sm:$0xff] %v393
    %426 = vst [vmem:[#allocation6 + $0x18] sm:$0xff] %v394
    %427 = vst [vmem:[#allocation6 + $0x20] sm:$0xff] %v395
    %428 = vst [vmem:[#allocation6 + $0x28] sm:$0xff] %v396
    %429 = vst [vmem:[#allocation6 + $0x30] sm:$0xff] %v397
    %430 = vst [vmem:[#allocation6 + $0x38] sm:$0xff] %v398
    %431 = vst [vmem:[#allocation6 + $0x40] sm:$0xff] %v399
    %432 = vst [vmem:[#allocation6 + $0x48] sm:$0xff] %v400
    %433 = vst [vmem:[#allocation6 + $0x50] sm:$0xff] %v401
    %434 = vst [vmem:[#allocation6 + $0x58] sm:$0xff] %v402
    %435 = vst [vmem:[#allocation6 + $0x60] sm:$0xff] %v403
    %436 = vst [vmem:[#allocation6 + $0x68] sm:$0xff] %v404
    %437 = vst [vmem:[#allocation6 + $0x70] sm:$0xff] %v405
    %438 = vst [vmem:[#allocation6 + $0x78] sm:$0xff] %v406
    %439 = vst [vmem:[#allocation6 + $0x80] sm:$0xff] %v407
    %440 = vst [vmem:[#allocation6 + $0x88] sm:$0xff] %v408
    %441 = vst [vmem:[#allocation6 + $0x90] sm:$0xff] %v409
    %442 = vst [vmem:[#allocation6 + $0x98] sm:$0xff] %v410
    %443 = vst [vmem:[#allocation6 + $0xa0] sm:$0xff] %v411
    %444 = vst [vmem:[#allocation6 + $0xa8] sm:$0xff] %v412
    %445 = vst [vmem:[#allocation6 + $0xb0] sm:$0xff] %v413
    %446 = vst [vmem:[#allocation6 + $0xb8] sm:$0xff] %v414
    %447 = vst [vmem:[#allocation6 + $0xc0] sm:$0xff] %v415
    %448 = vst [vmem:[#allocation6 + $0xc8] sm:$0xff] %v416
    %449 = vst [vmem:[#allocation6 + $0xd0] sm:$0xff] %v417
    %450 = vst [vmem:[#allocation6 + $0xd8] sm:$0xff] %v418
    %451 = vst [vmem:[#allocation6 + $0xe0] sm:$0xff] %v419
    %452 = vst [vmem:[#allocation6 + $0xe8] sm:$0xff] %v420
    %453 = vst [vmem:[#allocation6 + $0xf0] sm:$0xff] %v421
    %454 = vst [vmem:[#allocation6 + $0xf8] sm:$0xff] %v422
    // Predicated region
    $region18: #{tpu_custom_call.1} parent=1 // pred_check
      _
    $region19: #{tpu_custom_call.1} parent=1 // pred_check_branch
      %456 = sbr.rel (0) target = $region21
    $region20: #{tpu_custom_call.1} parent=1 // pred_region
      %s458 = ssub.s32 4096, 4096
      %459 = vsyncadd [#allocation5], %s458
      %s460 = sshll.u32 [#allocation6], 4
      %s461 = int_to_ptr.vmem [resolvable:$true] %s460
      %466 = dma.vmem_to_hbm [thread:$0]  %s461, 4096, %s3, [#allocation5], 128, 128, 8
    $region21: #{tpu_custom_call.1} parent=1 // pred_fallthru
      _
    // Predicated region
    $region22: #{tpu_custom_call.1} parent=1 // pred_check
      _
    $region23: #{tpu_custom_call.1} parent=1 // pred_check_branch
      %468 = sbr.rel (0) target = $region25
    $region24: #{tpu_custom_call.1} parent=1 // pred_region
      %469 = dma.done [#allocation5], 4096
    $region25: #{tpu_custom_call.1} parent=1 // pred_fallthru
      _
    %470 = vsyncpa [#allocation4], 1
    %471 = vsyncpa [#allocation5], 1

</llo_original>
